<compile_context>
chip_gen: v5e
topology: v5e:2x2
jax: 0.10.0
libtpu: 0.0.40
codegen_flags: <defaults>
</compile_context>

<pallas_src>
import functools

import jax
import jax.numpy as jnp
from jax import lax
from jax.experimental import pallas as pl
from jax.experimental.pallas import tpu as pltpu

_LANES = 256            # lane width of every block (2 x 128)
_MAX_BLOCK_ROWS = 2048  # 2 MiB f32 per block; keeps buffers + spills < 32 MiB


def _mlp_kernel(p_ref, x_ref, o_ref):
    """Full forward pass on one dense (block_rows, 256) tile.

    p_ref : (12,) SMEM  [w1_00,w1_01,w1_10,w1_11,b1_0,b1_1,
                         w2_00,w2_01,w2_10,w2_11,b2_0,b2_1]  (PyTorch W[out,in])
    x_ref : (br, 256) VMEM; lanes interleave features (row-major view of the
            original (B, 2) input): even lane = feature 0, odd lane = feature 1.
    o_ref : (br, 256) VMEM, same interleaved layout.
    """
    x = x_ref[...]                                    # (br, 256) f32
    lanes = x.shape[1]

    # Parity over the lane axis: True where the lane holds (output) feature 0.
    lane_idx = lax.broadcasted_iota(jnp.int32, (1, lanes), 1)
    even = (lane_idx % 2) == 0                        # (1, 256)

    # Scalar weights from SMEM (free scalar path).
    w1_00 = p_ref[0]; w1_01 = p_ref[1]; w1_10 = p_ref[2]; w1_11 = p_ref[3]
    b1_0 = p_ref[4]; b1_1 = p_ref[5]
    w2_00 = p_ref[6]; w2_01 = p_ref[7]; w2_10 = p_ref[8]; w2_11 = p_ref[9]
    b2_0 = p_ref[10]; b2_1 = p_ref[11]

    # Per-lane weight/bias rows (1, 256): a lane computing output feature f
    # uses "self" weight W[f, f] and "partner" weight W[f, 1-f].
    w1_s = jnp.where(even, w1_00, w1_11)
    w1_p = jnp.where(even, w1_01, w1_10)
    b1_v = jnp.where(even, b1_0, b1_1)
    w2_s = jnp.where(even, w2_00, w2_11)
    w2_p = jnp.where(even, w2_01, w2_10)
    b2_v = jnp.where(even, b2_0, b2_1)

    def partner(v):
        # Partner feature of lane i lives at lane i+1 (even i) / i-1 (odd i).
        nxt = pltpu.roll(v, lanes - 1, axis=1)        # lane i <- lane i+1
        prv = pltpu.roll(v, 1, axis=1)                # lane i <- lane i-1
        return jnp.where(even, nxt, prv)

    # capa1 + tanh (VPU FMAs + XLU rolls + EUP tanh), then capa2 + tanh.
    h = jnp.tanh(x * w1_s + partner(x) * w1_p + b1_v)
    y = jnp.tanh(h * w2_s + partner(h) * w2_p + b2_v)

    o_ref[...] = y                                    # single unmasked dense store


def _round_up(n, m):
    return ((n + m - 1) // m) * m


@functools.partial(jax.jit, static_argnames=("block_rows",))
def mlp_forward(x, w1, b1, w2, b2, *, block_rows=1024):
    """x: (B, 2) float32; w1, w2: (2, 2) PyTorch layout (out, in); b1, b2: (2,)."""
    B, F = x.shape
    assert F == 2

    # All 12 parameters as a single flat SMEM vector (scalar path, no VMEM tiles).
    params = jnp.concatenate(
        [w1.reshape(-1), b1.reshape(-1), w2.reshape(-1), b2.reshape(-1)]
    ).astype(jnp.float32)

    # Interleaved lane-dense view: (B, 2) row-major == (2B,) == (rows, 256).
    flat = x.astype(jnp.float32).reshape(-1)          # (2B,) contiguous, no transpose
    n = flat.shape[0]
    n_pad = _round_up(n, _LANES)                      # pad only if B % 128 != 0
    if n_pad != n:
        flat = jnp.pad(flat, (0, n_pad - n))
    rows = n_pad // _LANES
    xt = flat.reshape(rows, _LANES)

    # Block-row choice: >=2 grid steps whenever there is enough work (so
    # dimension_semantics=("parallel",) can split across TensorCores), capped
    # so double-buffered I/O + elementwise intermediates stay inside VMEM.
    block_rows = min(_MAX_BLOCK_ROWS, max(8, _round_up(int(block_rows), 8)))
    if rows <= 8:
        br = rows                                     # one block == full array
    else:
        br = min(block_rows, _round_up(pl.cdiv(rows, 2), 8))
    n_tiles = pl.cdiv(rows, br)                       # ragged last block is OK

    out = pl.pallas_call(
        _mlp_kernel,
        out_shape=jax.ShapeDtypeStruct((rows, _LANES), jnp.float32),
        grid=(n_tiles,),
        in_specs=[
            pl.BlockSpec(memory_space=pltpu.MemorySpace.SMEM),   # params (12,)
            pl.BlockSpec((br, _LANES), lambda i: (i, 0)),        # x tile
        ],
        out_specs=pl.BlockSpec((br, _LANES), lambda i: (i, 0)),
        compiler_params=pltpu.CompilerParams(
            dimension_semantics=("parallel",),
            vmem_limit_bytes=32 * 1024 * 1024,
        ),
    )(params, xt)

    # Back to the (B, 2) contract: pure reshapes of contiguous data plus a
    # slice of the at-most-255-element padding tail; no transposes.
    return out.reshape(-1)[:n].reshape(B, 2)


def _init_linear(key, out_features, in_features):
    """Deterministic PyTorch-default-style init: U(-1/sqrt(in), 1/sqrt(in))."""
    kw, kb = jax.random.split(key)
    bound = 1.0 / jnp.sqrt(jnp.float32(in_features))
    w = jax.random.uniform(kw, (out_features, in_features), jnp.float32,
                           minval=-bound, maxval=bound)
    b = jax.random.uniform(kb, (out_features,), jnp.float32,
                           minval=-bound, maxval=bound)
    return w, b


def _reference(x, w1, b1, w2, b2):
    return jnp.tanh(jnp.tanh(x @ w1.T + b1) @ w2.T + b2)


if __name__ == "__main__":
    key = jax.random.PRNGKey(0)
    kx, k1, k2, kx2 = jax.random.split(key, 4)

    w1, b1 = _init_linear(k1, 2, 2)   # capa1
    w2, b2 = _init_linear(k2, 2, 2)   # capa2

    # Small batch, consistent with nn.Linear(2, 2): single-block path.
    B = 8
    x = jax.random.normal(kx, (B, 2), jnp.float32)
    out = jax.block_until_ready(mlp_forward(x, w1, b1, w2, b2))
    ref = _reference(x, w1, b1, w2, b2)
    assert out.shape == (B, 2)
    assert jnp.allclose(out, ref, atol=1e-5, rtol=1e-5), "mismatch vs reference (small B)"

    # Larger ragged batch with a small block_rows to exercise the padded,
    # multi-tile batch-parallel grid path.
    B2 = 3000
    x2 = jax.random.normal(kx2, (B2, 2), jnp.float32)
    out2 = jax.block_until_ready(mlp_forward(x2, w1, b1, w2, b2, block_rows=8))
    ref2 = _reference(x2, w1, b1, w2, b2)
    assert out2.shape == (B2, 2)
    assert jnp.allclose(out2, ref2, atol=1e-5, rtol=1e-5), "mismatch vs reference (tiled B)"

    print("KERNEL_OK")
</pallas_src>

<mosaic_0001>
module attributes {stable_mosaic.version = 11 : i64} {
  func.func @_mlp_kernel(%arg0: i32, %arg1: memref<12xf32, #tpu.memory_space<smem>>, %arg2: memref<1x256xf32, #tpu.memory_space<vmem>>, %arg3: memref<1x256xf32, #tpu.memory_space<vmem>>) attributes {dimension_semantics = [#tpu.dimension_semantics<parallel>], iteration_bounds = array<i64: 1>, scalar_prefetch = 0 : i64, scratch_operands = 0 : i64, tpu.core_type = #tpu.core_type<tc>, window_params = [{transform_indices = @transform_0, window_bounds = array<i64: 12>}, {transform_indices = @transform_1, window_bounds = array<i64: 1, 256>}, {transform_indices = @transform_2, window_bounds = array<i64: 1, 256>}]} {
    %c0 = arith.constant 0 : index
    %c0_0 = arith.constant 0 : index
    %0 = vector.load %arg2[%c0, %c0_0] : memref<1x256xf32, #tpu.memory_space<vmem>>, vector<1x256xf32>
    %1 = tpu.iota {dimensions = array<i32: 1>} : vector<1x256xi32>
    %c2_i32 = arith.constant 2 : i32
    %c0_i32 = arith.constant 0 : i32
    %2 = arith.cmpi eq, %c2_i32, %c0_i32 : i32
    %c1_i32 = arith.constant 1 : i32
    %3 = arith.select %2, %c1_i32, %c2_i32 : i32
    %4 = vector.broadcast %3 : i32 to vector<1x256xi32>
    %5 = arith.remsi %1, %4 : vector<1x256xi32>
    %c0_i32_1 = arith.constant 0 : i32
    %6 = vector.broadcast %c0_i32_1 : i32 to vector<1x256xi32>
    %7 = arith.cmpi ne, %5, %6 : vector<1x256xi32>
    %c0_i32_2 = arith.constant 0 : i32
    %8 = vector.broadcast %c0_i32_2 : i32 to vector<1x256xi32>
    %9 = arith.cmpi slt, %5, %8 : vector<1x256xi32>
    %c0_i32_3 = arith.constant 0 : i32
    %10 = arith.cmpi slt, %3, %c0_i32_3 : i32
    %11 = vector.broadcast %10 : i1 to vector<1x256xi1>
    %12 = vector.broadcast %11 : vector<1x256xi1> to vector<1x256xi1>
    %13 = arith.xori %9, %12 : vector<1x256xi1>
    %14 = arith.andi %13, %7 : vector<1x256xi1>
    %15 = vector.broadcast %3 : i32 to vector<1x256xi32>
    %16 = arith.addi %5, %15 : vector<1x256xi32>
    %17 = arith.select %14, %16, %5 : vector<1x256xi1>, vector<1x256xi32>
    %c0_i32_4 = arith.constant 0 : i32
    %18 = vector.broadcast %c0_i32_4 : i32 to vector<1x256xi32>
    %19 = arith.cmpi eq, %17, %18 : vector<1x256xi32>
    %c0_5 = arith.constant 0 : index
    %20 = memref.load %arg1[%c0_5] : memref<12xf32, #tpu.memory_space<smem>>
    %c1 = arith.constant 1 : index
    %21 = memref.load %arg1[%c1] : memref<12xf32, #tpu.memory_space<smem>>
    %c2 = arith.constant 2 : index
    %22 = memref.load %arg1[%c2] : memref<12xf32, #tpu.memory_space<smem>>
    %c3 = arith.constant 3 : index
    %23 = memref.load %arg1[%c3] : memref<12xf32, #tpu.memory_space<smem>>
    %c4 = arith.constant 4 : index
    %24 = memref.load %arg1[%c4] : memref<12xf32, #tpu.memory_space<smem>>
    %c5 = arith.constant 5 : index
    %25 = memref.load %arg1[%c5] : memref<12xf32, #tpu.memory_space<smem>>
    %c6 = arith.constant 6 : index
    %26 = memref.load %arg1[%c6] : memref<12xf32, #tpu.memory_space<smem>>
    %c7 = arith.constant 7 : index
    %27 = memref.load %arg1[%c7] : memref<12xf32, #tpu.memory_space<smem>>
    %c8 = arith.constant 8 : index
    %28 = memref.load %arg1[%c8] : memref<12xf32, #tpu.memory_space<smem>>
    %c9 = arith.constant 9 : index
    %29 = memref.load %arg1[%c9] : memref<12xf32, #tpu.memory_space<smem>>
    %c10 = arith.constant 10 : index
    %30 = memref.load %arg1[%c10] : memref<12xf32, #tpu.memory_space<smem>>
    %c11 = arith.constant 11 : index
    %31 = memref.load %arg1[%c11] : memref<12xf32, #tpu.memory_space<smem>>
    %32 = vector.broadcast %20 : f32 to vector<1x256xf32>
    %33 = vector.broadcast %23 : f32 to vector<1x256xf32>
    %34 = arith.select %19, %32, %33 : vector<1x256xi1>, vector<1x256xf32>
    %35 = vector.broadcast %21 : f32 to vector<1x256xf32>
    %36 = vector.broadcast %22 : f32 to vector<1x256xf32>
    %37 = arith.select %19, %35, %36 : vector<1x256xi1>, vector<1x256xf32>
    %38 = vector.broadcast %24 : f32 to vector<1x256xf32>
    %39 = vector.broadcast %25 : f32 to vector<1x256xf32>
    %40 = arith.select %19, %38, %39 : vector<1x256xi1>, vector<1x256xf32>
    %41 = vector.broadcast %26 : f32 to vector<1x256xf32>
    %42 = vector.broadcast %29 : f32 to vector<1x256xf32>
    %43 = arith.select %19, %41, %42 : vector<1x256xi1>, vector<1x256xf32>
    %44 = vector.broadcast %27 : f32 to vector<1x256xf32>
    %45 = vector.broadcast %28 : f32 to vector<1x256xf32>
    %46 = arith.select %19, %44, %45 : vector<1x256xi1>, vector<1x256xf32>
    %47 = vector.broadcast %30 : f32 to vector<1x256xf32>
    %48 = vector.broadcast %31 : f32 to vector<1x256xf32>
    %49 = arith.select %19, %47, %48 : vector<1x256xi1>, vector<1x256xf32>
    %50 = arith.mulf %0, %34 : vector<1x256xf32>
    %c255_i32 = arith.constant 255 : i32
    %51 = tpu.dynamic_rotate %0 by %c255_i32 dim 1 : vector<1x256xf32>, i32 -> vector<1x256xf32>
    %c1_i32_6 = arith.constant 1 : i32
    %52 = tpu.dynamic_rotate %0 by %c1_i32_6 dim 1 : vector<1x256xf32>, i32 -> vector<1x256xf32>
    %53 = arith.select %19, %51, %52 : vector<1x256xi1>, vector<1x256xf32>
    %54 = arith.mulf %53, %37 : vector<1x256xf32>
    %55 = arith.addf %50, %54 : vector<1x256xf32>
    %56 = arith.addf %55, %40 : vector<1x256xf32>
    %57 = math.tanh %56 : vector<1x256xf32>
    %58 = arith.mulf %57, %43 : vector<1x256xf32>
    %c255_i32_7 = arith.constant 255 : i32
    %59 = tpu.dynamic_rotate %57 by %c255_i32_7 dim 1 : vector<1x256xf32>, i32 -> vector<1x256xf32>
    %c1_i32_8 = arith.constant 1 : i32
    %60 = tpu.dynamic_rotate %57 by %c1_i32_8 dim 1 : vector<1x256xf32>, i32 -> vector<1x256xf32>
    %61 = arith.select %19, %59, %60 : vector<1x256xi1>, vector<1x256xf32>
    %62 = arith.mulf %61, %46 : vector<1x256xf32>
    %63 = arith.addf %58, %62 : vector<1x256xf32>
    %64 = arith.addf %63, %49 : vector<1x256xf32>
    %65 = math.tanh %64 : vector<1x256xf32>
    %c0_9 = arith.constant 0 : index
    %c0_10 = arith.constant 0 : index
    %66 = vector.load %arg3[%c0_9, %c0_10] : memref<1x256xf32, #tpu.memory_space<vmem>>, vector<1x256xf32>
    tpu.vector_store %arg3[%c0_9, %c0_10], %65 {strides = array<i32>} : memref<1x256xf32, #tpu.memory_space<vmem>>, vector<1x256xf32>,
    return
  }
  func.func @transform_0(%arg0: i32) -> i32 {
    %c0_i32 = arith.constant 0 : i32
    %c0_i32_0 = arith.constant 0 : i32
    return %c0_i32 : i32
  }
  func.func @transform_1(%arg0: i32) -> (i32, i32) {
    %c0_i32 = arith.constant 0 : i32
    %c0_i32_0 = arith.constant 0 : i32
    return %arg0, %c0_i32 : i32, i32
  }
  func.func @transform_2(%arg0: i32) -> (i32, i32) {
    %c0_i32 = arith.constant 0 : i32
    %c0_i32_0 = arith.constant 0 : i32
    return %arg0, %c0_i32 : i32, i32
  }
}

</mosaic_0001>

<llo_original>
// kernel: mlp_forward.1
$region0: #{mlp_forward.1}
  #allocation0 [shape = 'u32[]', space=smem, size = 0x4, offset = 0x4, fixed_abs, tag = 'smem constant byte address 0x4 - core index']
  #allocation1 [shape = 'u32[72,128]{1,0:T(1,128)}', space=vmem, size = 0x9000, scoped, tag = 'internal scratch']
  %s0 = inlined_call_operand.vmem [shape: f32[12], index: 0, kind: input, shape index: {}]
  %s1 = inlined_call_operand.vmem [shape: f32[1,256], index: 1, kind: input, shape index: {}]
  %s2 = inlined_call_operand.vmem [shape: f32[1,256], index: 2, kind: output, shape index: {}]
  %s3 = sld [smem:[#allocation0]]
  $region22: #{mlp_forward.1} parent=0
    _
  %s5 = ssub.s32 1, %s3
  %s6 = scalar_select 0, %s5, %s3
  $region1: #{mlp_forward.1} parent=0
    #allocation2 [shape = 'u8[512]{0}', space=smem, size = 0x200, scoped, tag = 'input window, operand 0, single buffered']
    #allocation3 [shape = 's32[1]{0}', space=sflag, size = 0x4, scoped, tag = 'scoped memory for mlp_forward.1']
    %7 = vsyncpa [#allocation3], 0
    // Predicated region
    $region2: #{mlp_forward.1} parent=1 // pred_check
      _
    $region3: #{mlp_forward.1} parent=1 // pred_check_branch
      %9 = sbr.rel (0) target = $region5
    $region4: #{mlp_forward.1} parent=1 // pred_region
      %11 = vsyncadd [#allocation3], 0
      %s13 = sshll.u32 %s0, 4
      %s14 = int_to_ptr.vmem [resolvable:$true] %s13
      %16 = dma.vmem_to_smem %s14, 16, [#allocation2], [#allocation3]
    $region5: #{mlp_forward.1} parent=1 // pred_fallthru
      _
    // Predicated region
    $region6: #{mlp_forward.1} parent=1 // pred_check
      _
    $region7: #{mlp_forward.1} parent=1 // pred_check_branch
      %18 = sbr.rel (0) target = $region9
    $region8: #{mlp_forward.1} parent=1 // pred_region
      _
    $region9: #{mlp_forward.1} parent=1 // pred_fallthru
      _
    // Predicated region
    $region10: #{mlp_forward.1} parent=1 // pred_check
      _
    $region11: #{mlp_forward.1} parent=1 // pred_check_branch
      %20 = sbr.rel (0) target = $region13
    $region12: #{mlp_forward.1} parent=1 // pred_region
      %22 = dma.done [#allocation3], 16
    $region13: #{mlp_forward.1} parent=1 // pred_fallthru
      _
    %23 = sfence
    %v24 = vld [vmem:[%s1] sm:$0x3]
    %v25 = vlaneseq
    %v26 = vand.u32 %v25, 127
    %v27 = vadd.s32 %v26, 128
    %vm28 = vcmp.lt.s32.totalorder %v26, 0
    %v29 = vsub.s32 0, %v26
    %v30 = vsel %vm28, %v29, %v26
    %v31 = vshrl.u32 %v30, 1
    %v32 = vand.u32 %v30, 1
    %v33 = vsub.s32 0, %v32
    %v34 = vsel %vm28, %v33, %v32
    %vm35 = vcmp.lt.s32.totalorder %v27, 0
    %v36 = vsub.s32 0, %v27
    %v37 = vsel %vm35, %v36, %v27
    %v38 = vshrl.u32 %v37, 1
    %v39 = vand.u32 %v37, 1
    %v40 = vsub.s32 0, %v39
    %v41 = vsel %vm35, %v40, %v39
    %vm42 = vcmp.ne.s32.totalorder %v34, 0
    %vm43 = vcmp.ne.s32.totalorder %v41, 0
    %vm44 = vcmp.lt.s32.totalorder %v34, 0
    %vm45 = vcmp.lt.s32.totalorder %v41, 0
    %vm46 = vmand %vm44, %vm42
    %vm47 = vmand %vm45, %vm43
    %v48 = vadd.s32 %v34, 2
    %v49 = vadd.s32 %v41, 2
    %v50 = vsel %vm46, %v48, %v34
    %v51 = vsel %vm47, %v49, %v41
    %vm52 = vcmp.eq.s32.totalorder %v50, 0
    %vm53 = vcmp.eq.s32.totalorder %v51, 0
    %s54 = sld [smem:[#allocation2]]
    %s55 = sld [smem:[#allocation2 + $0x1]]
    %s56 = sld [smem:[#allocation2 + $0x2]]
    %s57 = sld [smem:[#allocation2 + $0x3]]
    %s58 = sld [smem:[#allocation2 + $0x4]]
    %s59 = sld [smem:[#allocation2 + $0x5]]
    %s60 = sld [smem:[#allocation2 + $0x6]]
    %s61 = sld [smem:[#allocation2 + $0x7]]
    %s62 = sld [smem:[#allocation2 + $0x8]]
    %s63 = sld [smem:[#allocation2 + $0x9]]
    %s64 = sld [smem:[#allocation2 + $0xa]]
    %s65 = sld [smem:[#allocation2 + $0xb]]
    %v66 = vstv %s54
    %v67 = vstv %s57
    %v68 = vsel %vm52, %v66, %v67
    %v69 = vsel %vm53, %v66, %v67
    %v70 = vstv %s55
    %v71 = vstv %s56
    %v72 = vsel %vm52, %v70, %v71
    %v73 = vsel %vm53, %v70, %v71
    %v74 = vstv %s58
    %v75 = vstv %s59
    %v76 = vsel %vm52, %v74, %v75
    %v77 = vsel %vm53, %v74, %v75
    %v78 = vstv %s60
    %v79 = vstv %s63
    %v80 = vsel %vm52, %v78, %v79
    %v81 = vsel %vm53, %v78, %v79
    %v82 = vstv %s61
    %v83 = vstv %s62
    %v84 = vsel %vm52, %v82, %v83
    %v85 = vsel %vm53, %v82, %v83
    %v86 = vstv %s64
    %v87 = vstv %s65
    %v88 = vsel %vm52, %v86, %v87
    %v89 = vsel %vm53, %v86, %v87
    %v92 = vrot.slane %v69, 7
    %vm93 = vcmask 1040384
    %v94 = vsel %vm93, %v68, %v92
    %v96 = vmul.f32 %v24, %v94
    %v98 = vperm.slane %v24, 0
    %v99 = vperm.slane %v24, 1
    %102 = vrot.lane.b32.xlu0 %v98, 127
    %v103 = vpop.permute.xlu0 %102
    %104 = vrot.lane.b32.xlu0 %v99, 127
    %v105 = vpop.permute.xlu0 %104
    %vm106 = vcmp.lt.s32.totalorder %v26, 127
    %v107 = vsel %vm106, %v103, %v105
    %v108 = vsel %vm106, %v105, %v103
    %109 = vrot.lane.b32.xlu0 %v98, 1
    %v110 = vpop.permute.xlu0 %109
    %111 = vrot.lane.b32.xlu0 %v99, 1
    %v112 = vpop.permute.xlu0 %111
    %vm113 = vcmp.lt.s32.totalorder %v26, 1
    %v114 = vsel %vm113, %v110, %v112
    %v115 = vsel %vm113, %v112, %v110
    %v116 = vsel %vm52, %v107, %v115
    %v117 = vsel %vm53, %v108, %v114
    %v118 = vmul.f32 %v116, %v72
    %v119 = vmul.f32 %v117, %v73
    %v122 = vrot.slane %v119, 7
    %v123 = vsel %vm93, %v118, %v122
    %v125 = vadd.f32 %v96, %v123
    %v128 = vrot.slane %v77, 7
    %v129 = vsel %vm93, %v76, %v128
    %v131 = vadd.f32 %v125, %v129
    %v132 = vtanh.pop %v131
    %v135 = vrot.slane %v81, 7
    %v136 = vsel %vm93, %v80, %v135
    %v138 = vmul.f32 %v132, %v136
    %v140 = vperm.slane %v132, 0
    %v141 = vperm.slane %v132, 1
    %144 = vrot.lane.b32.xlu0 %v140, 127
    %v145 = vpop.permute.xlu0 %144
    %146 = vrot.lane.b32.xlu0 %v141, 127
    %v147 = vpop.permute.xlu0 %146
    %v148 = vsel %vm106, %v145, %v147
    %v149 = vsel %vm106, %v147, %v145
    %150 = vrot.lane.b32.xlu0 %v140, 1
    %v151 = vpop.permute.xlu0 %150
    %152 = vrot.lane.b32.xlu0 %v141, 1
    %v153 = vpop.permute.xlu0 %152
    %v154 = vsel %vm113, %v151, %v153
    %v155 = vsel %vm113, %v153, %v151
    %v156 = vsel %vm52, %v148, %v155
    %v157 = vsel %vm53, %v149, %v154
    %v158 = vmul.f32 %v156, %v84
    %v159 = vmul.f32 %v157, %v85
    %v162 = vrot.slane %v159, 7
    %v163 = vsel %vm93, %v158, %v162
    %v165 = vadd.f32 %v138, %v163
    %v168 = vrot.slane %v89, 7
    %v169 = vsel %vm93, %v88, %v168
    %v171 = vadd.f32 %v165, %v169
    %v172 = vtanh.pop %v171
    %v173 = vlaneseq
    %vm174 = vcmp.ge.s32.totalorder %v173, 0
    %vm175 = vcmp.lt.s32.totalorder %v173, 256
    %vm176 = vmand %vm174, %vm175
    %177 = vst.msk [vmem:[%s2] sm:$0x3] %vm176, %v172
    // Predicated region
    $region14: #{mlp_forward.1} parent=1 // pred_check
      _
    $region15: #{mlp_forward.1} parent=1 // pred_check_branch
      %179 = sbr.rel (0) target = $region17
    $region16: #{mlp_forward.1} parent=1 // pred_region
      _
    $region17: #{mlp_forward.1} parent=1 // pred_fallthru
      _
    // Predicated region
    $region18: #{mlp_forward.1} parent=1 // pred_check
      _
    $region19: #{mlp_forward.1} parent=1 // pred_check_branch
      %181 = sbr.rel (0) target = $region21
    $region20: #{mlp_forward.1} parent=1 // pred_region
      _
    $region21: #{mlp_forward.1} parent=1 // pred_fallthru
      _
    %182 = vsyncpa [#allocation3], 1

</llo_original>
